<compile_context>
chip_gen: v7x
topology: tpu7x:2x2x1
jax: 0.10.0
libtpu: 0.0.40
codegen_flags: <defaults>
</compile_context>

<pallas_src>
import math

import jax
import jax.numpy as jnp
from jax.experimental import pallas as pl
from jax.experimental.pallas import tpu as pltpu

H1 = 200          # logical hidden sizes (match the PyTorch module)
H2 = 300
H1_PAD = 256      # lane-aligned padded hidden sizes
H2_PAD = 384
LANE = 128
SUBLANE = 8


def _round_up(x, m):
    return ((x + m - 1) // m) * m


def _actor_kernel(ma_ref, x_ref, w1_ref, b1_ref, w2_ref, b2_ref, w3_ref,
                  b3_ref, o_ref):
    """One batch tile: (TB, S) f32 -> (TB, A_pad) f32."""
    max_action = ma_ref[0]                                   # SMEM scalar

    x = x_ref[...]                                           # (TB, S) f32

    # Layer 1: (TB, S) @ (S, 256) + (1, 256) -> relu
    w1 = w1_ref[...].astype(jnp.float32)
    h1 = jnp.dot(x, w1, preferred_element_type=jnp.float32)
    h1 = jnp.maximum(h1 + b1_ref[...], 0.0)

    # Layer 2: (TB, 256) @ (256, 384) + (1, 384) -> relu
    w2 = w2_ref[...].astype(jnp.float32)
    h2 = jnp.dot(h1, w2, preferred_element_type=jnp.float32)
    h2 = jnp.maximum(h2 + b2_ref[...], 0.0)

    # Layer 3: (TB, 384) @ (384, A_pad) + (1, A_pad) -> max_action * tanh
    w3 = w3_ref[...].astype(jnp.float32)
    h3 = jnp.dot(h2, w3, preferred_element_type=jnp.float32)
    o_ref[...] = (max_action * jnp.tanh(h3 + b3_ref[...])).astype(o_ref.dtype)


def actor_forward(x, params, max_action, *, tile_b=1024):
    """x: (B, state_dim) float32. params: dict from init_params()."""
    B, S = x.shape
    action_dim = params["action_dim"]
    A_pad = params["w3"].shape[1]

    # Pad batch to a sublane multiple, then to a multiple of the batch tile.
    B_pad = max(SUBLANE, _round_up(B, SUBLANE))
    tb = min(tile_b, B_pad)
    B_pad = _round_up(B_pad, tb)
    if B_pad != B:
        x = jnp.pad(x, ((0, B_pad - B), (0, 0)))

    grid = (B_pad // tb,)

    ma = jnp.asarray(max_action, dtype=jnp.float32).reshape((1,))

    const2d = lambda i: (0, 0)

    w_bytes = sum(
        int(params[k].size) * params[k].dtype.itemsize
        for k in ("w1", "b1", "w2", "b2", "w3", "b3"))
    cost = pl.CostEstimate(
        flops=2 * B_pad * (S * H1_PAD + H1_PAD * H2_PAD + H2_PAD * A_pad),
        transcendentals=B_pad * A_pad,
        bytes_accessed=int(x.size) * 4 + w_bytes + B_pad * A_pad * 4,
    )

    out = pl.pallas_call(
        _actor_kernel,
        out_shape=jax.ShapeDtypeStruct((B_pad, A_pad), jnp.float32),
        grid_spec=pltpu.PrefetchScalarGridSpec(
            num_scalar_prefetch=0,
            grid=grid,
            in_specs=[
                pl.BlockSpec(memory_space=pltpu.MemorySpace.SMEM),   # max_action
                pl.BlockSpec((tb, S), lambda i: (i, 0)),             # x tile
                pl.BlockSpec(params["w1"].shape, const2d),           # resident
                pl.BlockSpec(params["b1"].shape, const2d),
                pl.BlockSpec(params["w2"].shape, const2d),
                pl.BlockSpec(params["b2"].shape, const2d),
                pl.BlockSpec(params["w3"].shape, const2d),
                pl.BlockSpec(params["b3"].shape, const2d),
            ],
            out_specs=pl.BlockSpec((tb, A_pad), lambda i: (i, 0)),
        ),
        compiler_params=pltpu.CompilerParams(
            dimension_semantics=("parallel",),
        ),
        cost_estimate=cost,
    )(ma, x, params["w1"], params["b1"], params["w2"], params["b2"],
      params["w3"], params["b3"])

    # Strip batch / lane padding.
    return out[:B, :action_dim]


def init_params(key, state_dim, action_dim, weight_dtype=jnp.bfloat16):
    """PyTorch-Linear-style U(-1/sqrt(fan_in), +...) init, zero-padded to
    lane-aligned shapes. Weights stored in `weight_dtype` (bf16 halves weight
    DMA); biases stay f32."""
    ks = jax.random.split(key, 6)
    a_pad = max(LANE, _round_up(action_dim, LANE))

    def linear(kw, kb, fan_in, fan_out, in_pad, out_pad):
        bound = 1.0 / math.sqrt(fan_in)
        w = jax.random.uniform(kw, (fan_in, fan_out), jnp.float32, -bound, bound)
        b = jax.random.uniform(kb, (1, fan_out), jnp.float32, -bound, bound)
        w = jnp.pad(w, ((0, in_pad - fan_in), (0, out_pad - fan_out)))
        b = jnp.pad(b, ((0, 0), (0, out_pad - fan_out)))
        return w.astype(weight_dtype), b

    w1, b1 = linear(ks[0], ks[1], state_dim, H1, state_dim, H1_PAD)
    w2, b2 = linear(ks[2], ks[3], H1, H2, H1_PAD, H2_PAD)
    w3, b3 = linear(ks[4], ks[5], H2, action_dim, H2_PAD, a_pad)
    return {"w1": w1, "b1": b1, "w2": w2, "b2": b2, "w3": w3, "b3": b3,
            "action_dim": action_dim}


if __name__ == "__main__":
    key = jax.random.PRNGKey(0)
    k_params, k_x = jax.random.split(key)

    batch = 2
    state_dim = 16
    action_dim = 4
    max_action = 2.0

    params = init_params(k_params, state_dim, action_dim)
    x = jax.random.normal(k_x, (batch, state_dim), jnp.float32)

    out = actor_forward(x, params, max_action)
    out = jax.block_until_ready(out)
    assert out.shape == (batch, action_dim)

    # Pure-JAX reference using the same stored (padded, bf16) weights.
    w1 = params["w1"].astype(jnp.float32)
    w2 = params["w2"].astype(jnp.float32)
    w3 = params["w3"].astype(jnp.float32)
    h1 = jnp.maximum(x @ w1 + params["b1"], 0.0)
    h2 = jnp.maximum(h1 @ w2 + params["b2"], 0.0)
    ref = (max_action * jnp.tanh(h2 @ w3 + params["b3"]))[:, :action_dim]
    assert jnp.allclose(out, ref, atol=2e-4, rtol=2e-4), (
        f"max abs err {jnp.max(jnp.abs(out - ref))}")

    print("KERNEL_OK")
</pallas_src>

<mosaic_0001>
module attributes {stable_mosaic.version = 11 : i64} {
  func.func @_actor_kernel(%arg0: i32, %arg1: memref<1xf32, #tpu.memory_space<smem>>, %arg2: memref<8x16xf32, #tpu.memory_space<vmem>>, %arg3: memref<16x256xbf16, #tpu.memory_space<vmem>>, %arg4: memref<1x256xf32, #tpu.memory_space<vmem>>, %arg5: memref<256x384xbf16, #tpu.memory_space<vmem>>, %arg6: memref<1x384xf32, #tpu.memory_space<vmem>>, %arg7: memref<384x128xbf16, #tpu.memory_space<vmem>>, %arg8: memref<1x128xf32, #tpu.memory_space<vmem>>, %arg9: memref<8x128xf32, #tpu.memory_space<vmem>>) attributes {dimension_semantics = [#tpu.dimension_semantics<parallel>], iteration_bounds = array<i64: 1>, scalar_prefetch = 0 : i64, scratch_operands = 0 : i64, tpu.core_type = #tpu.core_type<tc>, window_params = [{transform_indices = @transform_0, window_bounds = array<i64: 1>}, {transform_indices = @transform_1, window_bounds = array<i64: 8, 16>}, {pipeline_mode = #tpu.pipeline_mode<synchronous>, transform_indices = @transform_2, window_bounds = array<i64: 16, 256>}, {pipeline_mode = #tpu.pipeline_mode<synchronous>, transform_indices = @transform_3, window_bounds = array<i64: 1, 256>}, {pipeline_mode = #tpu.pipeline_mode<synchronous>, transform_indices = @transform_4, window_bounds = array<i64: 256, 384>}, {pipeline_mode = #tpu.pipeline_mode<synchronous>, transform_indices = @transform_5, window_bounds = array<i64: 1, 384>}, {pipeline_mode = #tpu.pipeline_mode<synchronous>, transform_indices = @transform_6, window_bounds = array<i64: 384, 128>}, {pipeline_mode = #tpu.pipeline_mode<synchronous>, transform_indices = @transform_7, window_bounds = array<i64: 1, 128>}, {transform_indices = @transform_8, window_bounds = array<i64: 8, 128>}]} {
    %c0 = arith.constant 0 : index
    %0 = memref.load %arg1[%c0] : memref<1xf32, #tpu.memory_space<smem>>
    %c0_0 = arith.constant 0 : index
    %c0_1 = arith.constant 0 : index
    %1 = vector.load %arg2[%c0_0, %c0_1] : memref<8x16xf32, #tpu.memory_space<vmem>>, vector<8x16xf32>
    %c0_2 = arith.constant 0 : index
    %c0_3 = arith.constant 0 : index
    %2 = vector.load %arg3[%c0_2, %c0_3] : memref<16x256xbf16, #tpu.memory_space<vmem>>, vector<16x256xbf16>
    %3 = arith.extf %2 : vector<16x256xbf16> to vector<16x256xf32>
    %cst = arith.constant dense<0.000000e+00> : vector<8x256xf32>
    %4 = tpu.matmul %1, %3, %cst {dimension_numbers = #tpu.dot_dimension_numbers<[1], [0], [0], [1], [0, 0, 1, 1], [], []>} : vector<8x16xf32>, vector<16x256xf32>, vector<8x256xf32> -> vector<8x256xf32>
    %c0_4 = arith.constant 0 : index
    %c0_5 = arith.constant 0 : index
    %5 = vector.load %arg4[%c0_4, %c0_5] : memref<1x256xf32, #tpu.memory_space<vmem>>, vector<1x256xf32>
    %6 = vector.broadcast %5 : vector<1x256xf32> to vector<8x256xf32>
    %7 = arith.addf %4, %6 : vector<8x256xf32>
    %cst_6 = arith.constant 0.000000e+00 : f32
    %8 = vector.broadcast %cst_6 : f32 to vector<8x256xf32>
    %9 = arith.maximumf %7, %8 : vector<8x256xf32>
    %c0_7 = arith.constant 0 : index
    %c0_8 = arith.constant 0 : index
    %10 = vector.load %arg5[%c0_7, %c0_8] : memref<256x384xbf16, #tpu.memory_space<vmem>>, vector<256x384xbf16>
    %11 = arith.extf %10 : vector<256x384xbf16> to vector<256x384xf32>
    %cst_9 = arith.constant dense<0.000000e+00> : vector<8x384xf32>
    %12 = tpu.matmul %9, %11, %cst_9 {dimension_numbers = #tpu.dot_dimension_numbers<[1], [0], [0], [1], [0, 0, 1, 1], [], []>} : vector<8x256xf32>, vector<256x384xf32>, vector<8x384xf32> -> vector<8x384xf32>
    %c0_10 = arith.constant 0 : index
    %c0_11 = arith.constant 0 : index
    %13 = vector.load %arg6[%c0_10, %c0_11] : memref<1x384xf32, #tpu.memory_space<vmem>>, vector<1x384xf32>
    %14 = vector.broadcast %13 : vector<1x384xf32> to vector<8x384xf32>
    %15 = arith.addf %12, %14 : vector<8x384xf32>
    %cst_12 = arith.constant 0.000000e+00 : f32
    %16 = vector.broadcast %cst_12 : f32 to vector<8x384xf32>
    %17 = arith.maximumf %15, %16 : vector<8x384xf32>
    %c0_13 = arith.constant 0 : index
    %c0_14 = arith.constant 0 : index
    %18 = vector.load %arg7[%c0_13, %c0_14] : memref<384x128xbf16, #tpu.memory_space<vmem>>, vector<384x128xbf16>
    %19 = arith.extf %18 : vector<384x128xbf16> to vector<384x128xf32>
    %cst_15 = arith.constant dense<0.000000e+00> : vector<8x128xf32>
    %20 = tpu.matmul %17, %19, %cst_15 {dimension_numbers = #tpu.dot_dimension_numbers<[1], [0], [0], [1], [0, 0, 1, 1], [], []>} : vector<8x384xf32>, vector<384x128xf32>, vector<8x128xf32> -> vector<8x128xf32>
    %c0_16 = arith.constant 0 : index
    %c0_17 = arith.constant 0 : index
    %21 = vector.load %arg8[%c0_16, %c0_17] : memref<1x128xf32, #tpu.memory_space<vmem>>, vector<1x128xf32>
    %22 = vector.broadcast %21 : vector<1x128xf32> to vector<8x128xf32>
    %23 = arith.addf %20, %22 : vector<8x128xf32>
    %24 = math.tanh %23 : vector<8x128xf32>
    %25 = vector.broadcast %0 : f32 to vector<8x128xf32>
    %26 = arith.mulf %25, %24 : vector<8x128xf32>
    %c0_18 = arith.constant 0 : index
    %c0_19 = arith.constant 0 : index
    %27 = vector.load %arg9[%c0_18, %c0_19] : memref<8x128xf32, #tpu.memory_space<vmem>>, vector<8x128xf32>
    tpu.vector_store %arg9[%c0_18, %c0_19], %26 {strides = array<i32>} : memref<8x128xf32, #tpu.memory_space<vmem>>, vector<8x128xf32>,
    return
  }
  func.func @transform_0(%arg0: i32) -> i32 {
    %c0_i32 = arith.constant 0 : i32
    %c0_i32_0 = arith.constant 0 : i32
    return %c0_i32 : i32
  }
  func.func @transform_1(%arg0: i32) -> (i32, i32) {
    %c0_i32 = arith.constant 0 : i32
    %c0_i32_0 = arith.constant 0 : i32
    return %arg0, %c0_i32 : i32, i32
  }
  func.func @transform_2(%arg0: i32) -> (i32, i32) {
    %c0_i32 = arith.constant 0 : i32
    %c0_i32_0 = arith.constant 0 : i32
    %c0_i32_1 = arith.constant 0 : i32
    return %c0_i32, %c0_i32_0 : i32, i32
  }
  func.func @transform_3(%arg0: i32) -> (i32, i32) {
    %c0_i32 = arith.constant 0 : i32
    %c0_i32_0 = arith.constant 0 : i32
    %c0_i32_1 = arith.constant 0 : i32
    return %c0_i32, %c0_i32_0 : i32, i32
  }
  func.func @transform_4(%arg0: i32) -> (i32, i32) {
    %c0_i32 = arith.constant 0 : i32
    %c0_i32_0 = arith.constant 0 : i32
    %c0_i32_1 = arith.constant 0 : i32
    return %c0_i32, %c0_i32_0 : i32, i32
  }
  func.func @transform_5(%arg0: i32) -> (i32, i32) {
    %c0_i32 = arith.constant 0 : i32
    %c0_i32_0 = arith.constant 0 : i32
    %c0_i32_1 = arith.constant 0 : i32
    return %c0_i32, %c0_i32_0 : i32, i32
  }
  func.func @transform_6(%arg0: i32) -> (i32, i32) {
    %c0_i32 = arith.constant 0 : i32
    %c0_i32_0 = arith.constant 0 : i32
    %c0_i32_1 = arith.constant 0 : i32
    return %c0_i32, %c0_i32_0 : i32, i32
  }
  func.func @transform_7(%arg0: i32) -> (i32, i32) {
    %c0_i32 = arith.constant 0 : i32
    %c0_i32_0 = arith.constant 0 : i32
    %c0_i32_1 = arith.constant 0 : i32
    return %c0_i32, %c0_i32_0 : i32, i32
  }
  func.func @transform_8(%arg0: i32) -> (i32, i32) {
    %c0_i32 = arith.constant 0 : i32
    %c0_i32_0 = arith.constant 0 : i32
    return %arg0, %c0_i32 : i32, i32
  }
}

</mosaic_0001>

<llo_original>
// kernel: tpu_custom_call.1
$region0: #{tpu_custom_call.1}
  #allocation0 [shape = 'u32[]', space=smem, size = 0x4, offset = 0x4, fixed_abs, tag = 'smem constant byte address 0x4 - core index']
  #allocation1 [shape = 'u32[144,128]{1,0:T(1,128)}', space=vmem, size = 0x12000, scoped, tag = 'internal scratch']
  #allocation2 [shape = 'f32[1]{0:T(128)S(6)}', space=smem, size = 0x200, scoped, tag = 'scoped memory for tpu_custom_call.1']
  %s0 = inlined_call_operand.<no memory space> [shape: f32[1], index: 0, kind: input, shape index: {}]
  %s1 = inlined_call_operand.hbm [shape: f32[8,16], index: 1, kind: input, shape index: {}]
  %s2 = inlined_call_operand.hbm [shape: bf16[16,256], index: 2, kind: input, shape index: {}]
  %s3 = inlined_call_operand.vmem [shape: f32[1,256], index: 3, kind: input, shape index: {}]
  %s4 = inlined_call_operand.hbm [shape: bf16[256,384], index: 4, kind: input, shape index: {}]
  %s5 = inlined_call_operand.vmem [shape: f32[1,384], index: 5, kind: input, shape index: {}]
  %s6 = inlined_call_operand.hbm [shape: bf16[384,128], index: 6, kind: input, shape index: {}]
  %s7 = inlined_call_operand.vmem [shape: f32[1,128], index: 7, kind: input, shape index: {}]
  %s8 = inlined_call_operand.hbm [shape: f32[8,128], index: 8, kind: output, shape index: {}]
  %s9 = sld [smem:[#allocation0]]
  $region58: #{tpu_custom_call.1} parent=0
    _
  %s11 = ssub.s32 1, %s9
  %s12 = scalar_select 0, %s11, %s9
  %13 = sst [smem:[#allocation2]] %s0
  $region1: #{tpu_custom_call.1} parent=0
    #allocation3 [shape = 'u8[4096]{0}', space=vmem, size = 0x1000, scoped, tag = 'input window, operand 1, single buffered']
    #allocation4 [shape = 's32[1]{0}', space=sflag, size = 0x4, scoped, tag = 'scoped memory for tpu_custom_call.1']
    #allocation5 [shape = 's32[1]{0}', space=sflag, size = 0x4, scoped, tag = 'scoped memory for tpu_custom_call.1']
    #allocation6 [shape = 'u8[8192]{0}', space=vmem, size = 0x2000, scoped, tag = 'input window, operand 2, single buffered']
    #allocation7 [shape = 's32[1]{0}', space=sflag, size = 0x4, scoped, tag = 'scoped memory for tpu_custom_call.1']
    #allocation8 [shape = 'u8[196608]{0}', space=vmem, size = 0x30000, scoped, tag = 'input window, operand 4, single buffered']
    #allocation9 [shape = 'u8[98304]{0}', space=vmem, size = 0x18000, scoped, tag = 'input window, operand 6, single buffered']
    #allocation10 [shape = 's32[1]{0}', space=sflag, size = 0x4, scoped, tag = 'scoped memory for tpu_custom_call.1']
    #allocation11 [shape = 'u8[4096]{0}', space=vmem, size = 0x1000, scoped, tag = 'output window, operand 0, single buffered']
    %14 = vsyncpa [#allocation4], 0
    %15 = vsyncpa [#allocation7], 0
    %16 = vsyncpa [#allocation10], 0
    %17 = vsyncpa [#allocation5], 0
    // Predicated region
    $region2: #{tpu_custom_call.1} parent=1 // pred_check
      _
    $region3: #{tpu_custom_call.1} parent=1 // pred_check_branch
      %19 = sbr.rel (0) target = $region5
    $region4: #{tpu_custom_call.1} parent=1 // pred_region
      _
    $region5: #{tpu_custom_call.1} parent=1 // pred_fallthru
      _
    // Predicated region
    $region6: #{tpu_custom_call.1} parent=1 // pred_check
      _
    $region7: #{tpu_custom_call.1} parent=1 // pred_check_branch
      %21 = sbr.rel (0) target = $region9
    $region8: #{tpu_custom_call.1} parent=1 // pred_region
      %s23 = ssub.s32 128, 128
      %24 = vsyncadd [#allocation4], %s23
      %s26 = sshll.u32 [#allocation3], 4
      %s27 = int_to_ptr.vmem [resolvable:$true] %s26
      %29 = dma.hbm_to_vmem [thread:$0]  %s1, 128, %s27, [#allocation4]
    $region9: #{tpu_custom_call.1} parent=1 // pred_fallthru
      _
    // Predicated region
    $region10: #{tpu_custom_call.1} parent=1 // pred_check
      _
    $region11: #{tpu_custom_call.1} parent=1 // pred_check_branch
      %31 = sbr.rel (0) target = $region13
    $region12: #{tpu_custom_call.1} parent=1 // pred_region
      %s33 = ssub.s32 256, 256
      %34 = vsyncadd [#allocation7], %s33
      %s35 = sshll.u32 [#allocation6], 4
      %s36 = int_to_ptr.vmem [resolvable:$true] %s35
      %41 = dma.hbm_to_vmem [thread:$0]  %s2, 256, %s36, [#allocation7], 128, 128, 8
    $region13: #{tpu_custom_call.1} parent=1 // pred_fallthru
      _
    // Predicated region
    $region14: #{tpu_custom_call.1} parent=1 // pred_check
      _
    $region15: #{tpu_custom_call.1} parent=1 // pred_check_branch
      %43 = sbr.rel (0) target = $region17
    $region16: #{tpu_custom_call.1} parent=1 // pred_region
      _
    $region17: #{tpu_custom_call.1} parent=1 // pred_fallthru
      _
    // Predicated region
    $region18: #{tpu_custom_call.1} parent=1 // pred_check
      _
    $region19: #{tpu_custom_call.1} parent=1 // pred_check_branch
      %45 = sbr.rel (0) target = $region21
    $region20: #{tpu_custom_call.1} parent=1 // pred_region
      %s47 = ssub.s32 6144, 6144
      %48 = vsyncadd [#allocation7], %s47
      %s49 = sshll.u32 [#allocation8], 4
      %s50 = int_to_ptr.vmem [resolvable:$true] %s49
      %55 = dma.hbm_to_vmem [thread:$0]  %s4, 6144, %s50, [#allocation7], 192, 192, 12
    $region21: #{tpu_custom_call.1} parent=1 // pred_fallthru
      _
    // Predicated region
    $region22: #{tpu_custom_call.1} parent=1 // pred_check
      _
    $region23: #{tpu_custom_call.1} parent=1 // pred_check_branch
      %57 = sbr.rel (0) target = $region25
    $region24: #{tpu_custom_call.1} parent=1 // pred_region
      _
    $region25: #{tpu_custom_call.1} parent=1 // pred_fallthru
      _
    // Predicated region
    $region26: #{tpu_custom_call.1} parent=1 // pred_check
      _
    $region27: #{tpu_custom_call.1} parent=1 // pred_check_branch
      %59 = sbr.rel (0) target = $region29
    $region28: #{tpu_custom_call.1} parent=1 // pred_region
      %s61 = ssub.s32 3072, 3072
      %62 = vsyncadd [#allocation10], %s61
      %s63 = sshll.u32 [#allocation9], 4
      %s64 = int_to_ptr.vmem [resolvable:$true] %s63
      %69 = dma.hbm_to_vmem [thread:$0]  %s6, 3072, %s64, [#allocation10], 64, 64, 4
    $region29: #{tpu_custom_call.1} parent=1 // pred_fallthru
      _
    // Predicated region
    $region30: #{tpu_custom_call.1} parent=1 // pred_check
      _
    $region31: #{tpu_custom_call.1} parent=1 // pred_check_branch
      %71 = sbr.rel (0) target = $region33
    $region32: #{tpu_custom_call.1} parent=1 // pred_region
      _
    $region33: #{tpu_custom_call.1} parent=1 // pred_fallthru
      _
    // Predicated region
    $region34: #{tpu_custom_call.1} parent=1 // pred_check
      _
    $region35: #{tpu_custom_call.1} parent=1 // pred_check_branch
      %73 = sbr.rel (0) target = $region37
    $region36: #{tpu_custom_call.1} parent=1 // pred_region
      %74 = dma.done [#allocation4], 128
    $region37: #{tpu_custom_call.1} parent=1 // pred_fallthru
      _
    // Predicated region
    $region38: #{tpu_custom_call.1} parent=1 // pred_check
      _
    $region39: #{tpu_custom_call.1} parent=1 // pred_check_branch
      %76 = sbr.rel (0) target = $region41
    $region40: #{tpu_custom_call.1} parent=1 // pred_region
      %77 = dma.done [#allocation7], 256
    $region41: #{tpu_custom_call.1} parent=1 // pred_fallthru
      _
    // Predicated region
    $region42: #{tpu_custom_call.1} parent=1 // pred_check
      _
    $region43: #{tpu_custom_call.1} parent=1 // pred_check_branch
      %79 = sbr.rel (0) target = $region45
    $region44: #{tpu_custom_call.1} parent=1 // pred_region
      %80 = dma.done [#allocation7], 6144
    $region45: #{tpu_custom_call.1} parent=1 // pred_fallthru
      _
    // Predicated region
    $region46: #{tpu_custom_call.1} parent=1 // pred_check
      _
    $region47: #{tpu_custom_call.1} parent=1 // pred_check_branch
      %82 = sbr.rel (0) target = $region49
    $region48: #{tpu_custom_call.1} parent=1 // pred_region
      %83 = dma.done [#allocation10], 3072
    $region49: #{tpu_custom_call.1} parent=1 // pred_fallthru
      _
    %s84 = sld [smem:[#allocation2]]
    %v85 = vld [vmem:[#allocation3] sm:$0xff]
    %v86 = vld [vmem:[#allocation6] sm:$0xff]
    %v87 = vld [vmem:[#allocation6 + $0x8] sm:$0xff]
    %v88 = vunpack.c.l.bf16 %v86
    %v89 = vunpack.c.h.bf16 %v86
    %v90 = vunpack.c.l.bf16 %v87
    %v91 = vunpack.c.h.bf16 %v87
    %v92 = vld [vmem:[%s3] sm:$0x3]
    %v94 = vlaneseq
    %v95 = vshrl.u32 %v94, 7
    %v96 = vsub.s32 0, %v95
    %v97 = vrot.slane %v92, %v96
    %v98 = vlaneseq
    %v99 = vshrl.u32 %v98, 7
    %v100 = vsub.s32 1, %v99
    %v101 = vrot.slane %v92, %v100
    %vm104 = vcmask 130048
    %v106 = vsel %vm104, %v85, 0
    %108 = vmatprep.subr.mxu0 %v89
    %109 = vmatpush1.msra.mxu0 %v88
    %110 = vmatprep.subr.mxu0 %v91
    %111 = vmatpush1.msra.mxu0 %v90
    %112 = vmatprep.subr.mxu0 0.0
    %113 = vmatpush1.msra.mxu0 0.0
    %114 = vmatprep.subr.mxu0 0.0
    %115 = vmatpush1.msra.mxu0 0.0
    %116 = vmatprep.subr.mxu0 0.0
    %117 = vmatpush1.msra.mxu0 0.0
    %118 = vmatprep.subr.mxu0 0.0
    %119 = vmatpush1.msra.mxu0 0.0
    %120 = vmatprep.subr.mxu0 0.0
    %121 = vmatpush1.msra.mxu0 0.0
    %122 = vmatprep.subr.mxu0 0.0
    %123 = vmatpush1.msra.mxu0 0.0
    %124 = vmatprep.subr.mxu0 0.0
    %125 = vmatpush1.msra.mxu0 0.0
    %126 = vmatprep.subr.mxu0 0.0
    %127 = vmatpush1.msra.mxu0 0.0
    %128 = vmatprep.subr.mxu0 0.0
    %129 = vmatpush1.msra.mxu0 0.0
    %130 = vmatprep.subr.mxu0 0.0
    %131 = vmatpush1.msra.mxu0 0.0
    %132 = vmatprep.subr.mxu0 0.0
    %133 = vmatpush1.msra.mxu0 0.0
    %134 = vmatprep.subr.mxu0 0.0
    %135 = vmatpush1.msra.mxu0 0.0
    %136 = vmatprep.subr.mxu0 0.0
    %137 = vmatpush1.msra.mxu0 0.0
    %138 = vmatprep.subr.mxu0 0.0
    %139 = vmatpush1.msra.mxu0 0.0
    %140 = vmatprep.subr.mxu0 0.0
    %141 = vmatpush1.msra.mxu0 0.0
    %142 = vmatprep.subr.mxu0 0.0
    %143 = vmatpush1.msra.mxu0 0.0
    %144 = vmatprep.subr.mxu0 0.0
    %145 = vmatpush1.msra.mxu0 0.0
    %146 = vmatprep.subr.mxu0 0.0
    %147 = vmatpush1.msra.mxu0 0.0
    %148 = vmatprep.subr.mxu0 0.0
    %149 = vmatpush1.msra.mxu0 0.0
    %150 = vmatprep.subr.mxu0 0.0
    %151 = vmatpush1.msra.mxu0 0.0
    %152 = vmatprep.subr.mxu0 0.0
    %153 = vmatpush1.msra.mxu0 0.0
    %154 = vmatprep.subr.mxu0 0.0
    %155 = vmatpush1.msra.mxu0 0.0
    %156 = vmatprep.subr.mxu0 0.0
    %157 = vmatpush1.msra.mxu0 0.0
    %158 = vmatprep.subr.mxu0 0.0
    %159 = vmatpush1.msra.mxu0 0.0
    %160 = vmatprep.subr.mxu0 0.0
    %161 = vmatpush1.msra.mxu0 0.0
    %162 = vmatprep.subr.mxu0 0.0
    %163 = vmatpush1.msra.mxu0 0.0
    %164 = vmatprep.subr.mxu0 0.0
    %165 = vmatpush1.msra.mxu0 0.0
    %166 = vmatprep.subr.mxu0 0.0
    %167 = vmatpush1.msra.mxu0 0.0
    %168 = vmatprep.subr.mxu0 0.0
    %169 = vmatpush1.msra.mxu0 0.0
    %170 = vmatprep.subr.mxu0 0.0
    %171 = vmatpush1.msra.mxu0 0.0
    %172 = vmatprep.mubr.f32.mxu0 0.0
    %173 = vmatmul.mubr.f32.gmra.mrb[0].mxu0 %v106
    %v174 = vpop.f32.mrb[0].mxu0
    %v175 = vadd.f32 %v97, %v174
    %v176 = vpop.f32.mrb[0].mxu0
    %v177 = vadd.f32 %v101, %v176
    %178 = vdwg.mxu0
    %v179 = vmax.f32 %v175, 0.0
    %v180 = vmax.f32 %v177, 0.0
    %v181 = vld [vmem:[#allocation8] sm:$0xff]
    %v182 = vld [vmem:[#allocation8 + $0x8] sm:$0xf]
    %v183 = vld [vmem:[#allocation8 + $0xc] sm:$0xff]
    %v184 = vld [vmem:[#allocation8 + $0x14] sm:$0xf]
    %v185 = vld [vmem:[#allocation8 + $0x18] sm:$0xff]
    %v186 = vld [vmem:[#allocation8 + $0x20] sm:$0xf]
    %v187 = vld [vmem:[#allocation8 + $0x24] sm:$0xff]
    %v188 = vld [vmem:[#allocation8 + $0x2c] sm:$0xf]
    %v189 = vld [vmem:[#allocation8 + $0x30] sm:$0xff]
    %v190 = vld [vmem:[#allocation8 + $0x38] sm:$0xf]
    %v191 = vld [vmem:[#allocation8 + $0x3c] sm:$0xff]
    %v192 = vld [vmem:[#allocation8 + $0x44] sm:$0xf]
    %v193 = vld [vmem:[#allocation8 + $0x48] sm:$0xff]
    %v194 = vld [vmem:[#allocation8 + $0x50] sm:$0xf]
    %v195 = vld [vmem:[#allocation8 + $0x54] sm:$0xff]
    %v196 = vld [vmem:[#allocation8 + $0x5c] sm:$0xf]
    %v197 = vld [vmem:[#allocation8 + $0x60] sm:$0xff]
    %v198 = vld [vmem:[#allocation8 + $0x68] sm:$0xf]
    %v199 = vld [vmem:[#allocation8 + $0x6c] sm:$0xff]
    %v200 = vld [vmem:[#allocation8 + $0x74] sm:$0xf]
    %v201 = vld [vmem:[#allocation8 + $0x78] sm:$0xff]
    %v202 = vld [vmem:[#allocation8 + $0x80] sm:$0xf]
    %v203 = vld [vmem:[#allocation8 + $0x84] sm:$0xff]
    %v204 = vld [vmem:[#allocation8 + $0x8c] sm:$0xf]
    %v205 = vld [vmem:[#allocation8 + $0x90] sm:$0xff]
    %v206 = vld [vmem:[#allocation8 + $0x98] sm:$0xf]
    %v207 = vld [vmem:[#allocation8 + $0x9c] sm:$0xff]
    %v208 = vld [vmem:[#allocation8 + $0xa4] sm:$0xf]
    %v209 = vld [vmem:[#allocation8 + $0xa8] sm:$0xff]
    %v210 = vld [vmem:[#allocation8 + $0xb0] sm:$0xf]
    %v211 = vld [vmem:[#allocation8 + $0xb4] sm:$0xff]
    %v212 = vld [vmem:[#allocation8 + $0xbc] sm:$0xf]
    %v213 = vld [vmem:[#allocation8 + $0xc0] sm:$0xff]
    %v214 = vld [vmem:[#allocation8 + $0xc8] sm:$0xf]
    %v215 = vld [vmem:[#allocation8 + $0xcc] sm:$0xff]
    %v216 = vld [vmem:[#allocation8 + $0xd4] sm:$0xf]
    %v217 = vld [vmem:[#allocation8 + $0xd8] sm:$0xff]
    %v218 = vld [vmem:[#allocation8 + $0xe0] sm:$0xf]
    %v219 = vld [vmem:[#allocation8 + $0xe4] sm:$0xff]
    %v220 = vld [vmem:[#allocation8 + $0xec] sm:$0xf]
    %v221 = vld [vmem:[#allocation8 + $0xf0] sm:$0xff]
    %v222 = vld [vmem:[#allocation8 + $0xf8] sm:$0xf]
    %v223 = vld [vmem:[#allocation8 + $0xfc] sm:$0xff]
    %v224 = vld [vmem:[#allocation8 + $0x104] sm:$0xf]
    %v225 = vld [vmem:[#allocation8 + $0x108] sm:$0xff]
    %v226 = vld [vmem:[#allocation8 + $0x110] sm:$0xf]
    %v227 = vld [vmem:[#allocation8 + $0x114] sm:$0xff]
    %v228 = vld [vmem:[#allocation8 + $0x11c] sm:$0xf]
    %v229 = vld [vmem:[#allocation8 + $0x120] sm:$0xff]
    %v230 = vld [vmem:[#allocation8 + $0x128] sm:$0xf]
    %v231 = vld [vmem:[#allocation8 + $0x12c] sm:$0xff]
    %v232 = vld [vmem:[#allocation8 + $0x134] sm:$0xf]
    %v233 = vld [vmem:[#allocation8 + $0x138] sm:$0xff]
    %v234 = vld [vmem:[#allocation8 + $0x140] sm:$0xf]
    %v235 = vld [vmem:[#allocation8 + $0x144] sm:$0xff]
    %v236 = vld [vmem:[#allocation8 + $0x14c] sm:$0xf]
    %v237 = vld [vmem:[#allocation8 + $0x150] sm:$0xff]
    %v238 = vld [vmem:[#allocation8 + $0x158] sm:$0xf]
    %v239 = vld [vmem:[#allocation8 + $0x15c] sm:$0xff]
    %v240 = vld [vmem:[#allocation8 + $0x164] sm:$0xf]
    %v241 = vld [vmem:[#allocation8 + $0x168] sm:$0xff]
    %v242 = vld [vmem:[#allocation8 + $0x170] sm:$0xf]
    %v243 = vld [vmem:[#allocation8 + $0x174] sm:$0xff]
    %v244 = vld [vmem:[#allocation8 + $0x17c] sm:$0xf]
    %v245 = vunpack.c.l.bf16 %v181
    %v246 = vunpack.c.h.bf16 %v181
    %v247 = vunpack.c.l.bf16 %v182
    %v248 = vunpack.c.l.bf16 %v183
    %v249 = vunpack.c.h.bf16 %v183
    %v250 = vunpack.c.l.bf16 %v184
    %v251 = vunpack.c.l.bf16 %v185
    %v252 = vunpack.c.h.bf16 %v185
    %v253 = vunpack.c.l.bf16 %v186
    %v254 = vunpack.c.l.bf16 %v187
    %v255 = vunpack.c.h.bf16 %v187
    %v256 = vunpack.c.l.bf16 %v188
    %v257 = vunpack.c.l.bf16 %v189
    %v258 = vunpack.c.h.bf16 %v189
    %v259 = vunpack.c.l.bf16 %v190
    %v260 = vunpack.c.l.bf16 %v191
    %v261 = vunpack.c.h.bf16 %v191
    %v262 = vunpack.c.l.bf16 %v192
    %v263 = vunpack.c.l.bf16 %v193
    %v264 = vunpack.c.h.bf16 %v193
    %v265 = vunpack.c.l.bf16 %v194
    %v266 = vunpack.c.l.bf16 %v195
    %v267 = vunpack.c.h.bf16 %v195
    %v268 = vunpack.c.l.bf16 %v196
    %v269 = vunpack.c.l.bf16 %v197
    %v270 = vunpack.c.h.bf16 %v197
    %v271 = vunpack.c.l.bf16 %v198
    %v272 = vunpack.c.l.bf16 %v199
    %v273 = vunpack.c.h.bf16 %v199
    %v274 = vunpack.c.l.bf16 %v200
    %v275 = vunpack.c.l.bf16 %v201
    %v276 = vunpack.c.h.bf16 %v201
    %v277 = vunpack.c.l.bf16 %v202
    %v278 = vunpack.c.l.bf16 %v203
    %v279 = vunpack.c.h.bf16 %v203
    %v280 = vunpack.c.l.bf16 %v204
    %v281 = vunpack.c.l.bf16 %v205
    %v282 = vunpack.c.h.bf16 %v205
    %v283 = vunpack.c.l.bf16 %v206
    %v284 = vunpack.c.l.bf16 %v207
    %v285 = vunpack.c.h.bf16 %v207
    %v286 = vunpack.c.l.bf16 %v208
    %v287 = vunpack.c.l.bf16 %v209
    %v288 = vunpack.c.h.bf16 %v209
    %v289 = vunpack.c.l.bf16 %v210
    %v290 = vunpack.c.l.bf16 %v211
    %v291 = vunpack.c.h.bf16 %v211
    %v292 = vunpack.c.l.bf16 %v212
    %v293 = vunpack.c.l.bf16 %v213
    %v294 = vunpack.c.h.bf16 %v213
    %v295 = vunpack.c.l.bf16 %v214
    %v296 = vunpack.c.l.bf16 %v215
    %v297 = vunpack.c.h.bf16 %v215
    %v298 = vunpack.c.l.bf16 %v216
    %v299 = vunpack.c.l.bf16 %v217
    %v300 = vunpack.c.h.bf16 %v217
    %v301 = vunpack.c.l.bf16 %v218
    %v302 = vunpack.c.l.bf16 %v219
    %v303 = vunpack.c.h.bf16 %v219
    %v304 = vunpack.c.l.bf16 %v220
    %v305 = vunpack.c.l.bf16 %v221
    %v306 = vunpack.c.h.bf16 %v221
    %v307 = vunpack.c.l.bf16 %v222
    %v308 = vunpack.c.l.bf16 %v223
    %v309 = vunpack.c.h.bf16 %v223
    %v310 = vunpack.c.l.bf16 %v224
    %v311 = vunpack.c.l.bf16 %v225
    %v312 = vunpack.c.h.bf16 %v225
    %v313 = vunpack.c.l.bf16 %v226
    %v314 = vunpack.c.l.bf16 %v227
    %v315 = vunpack.c.h.bf16 %v227
    %v316 = vunpack.c.l.bf16 %v228
    %v317 = vunpack.c.l.bf16 %v229
    %v318 = vunpack.c.h.bf16 %v229
    %v319 = vunpack.c.l.bf16 %v230
    %v320 = vunpack.c.l.bf16 %v231
    %v321 = vunpack.c.h.bf16 %v231
    %v322 = vunpack.c.l.bf16 %v232
    %v323 = vunpack.c.l.bf16 %v233
    %v324 = vunpack.c.h.bf16 %v233
    %v325 = vunpack.c.l.bf16 %v234
    %v326 = vunpack.c.l.bf16 %v235
    %v327 = vunpack.c.h.bf16 %v235
    %v328 = vunpack.c.l.bf16 %v236
    %v329 = vunpack.c.l.bf16 %v237
    %v330 = vunpack.c.h.bf16 %v237
    %v331 = vunpack.c.l.bf16 %v238
    %v332 = vunpack.c.l.bf16 %v239
    %v333 = vunpack.c.h.bf16 %v239
    %v334 = vunpack.c.l.bf16 %v240
    %v335 = vunpack.c.l.bf16 %v241
    %v336 = vunpack.c.h.bf16 %v241
    %v337 = vunpack.c.l.bf16 %v242
    %v338 = vunpack.c.l.bf16 %v243
    %v339 = vunpack.c.h.bf16 %v243
    %v340 = vunpack.c.l.bf16 %v244
    %v341 = vld [vmem:[%s5] sm:$0x7]
    %v343 = vlaneseq
    %v344 = vshrl.u32 %v343, 7
    %v345 = vsub.s32 0, %v344
    %v346 = vrot.slane %v341, %v345
    %v347 = vlaneseq
    %v348 = vshrl.u32 %v347, 7
    %v349 = vsub.s32 1, %v348
    %v350 = vrot.slane %v341, %v349
    %v351 = vlaneseq
    %v352 = vshrl.u32 %v351, 7
    %v353 = vsub.s32 2, %v352
    %v354 = vrot.slane %v341, %v353
    %358 = vmatprep.subr.mxu0 %v246
    %359 = vmatpush1.msra.mxu0 %v245
    %360 = vmatprep.subr.mxu0 %v249
    %361 = vmatpush1.msra.mxu0 %v248
    %362 = vmatprep.subr.mxu0 %v252
    %363 = vmatpush1.msra.mxu0 %v251
    %364 = vmatprep.subr.mxu0 %v255
    %365 = vmatpush1.msra.mxu0 %v254
    %366 = vmatprep.subr.mxu0 %v258
    %367 = vmatpush1.msra.mxu0 %v257
    %368 = vmatprep.subr.mxu0 %v261
    %369 = vmatpush1.msra.mxu0 %v260
    %370 = vmatprep.subr.mxu0 %v264
    %371 = vmatpush1.msra.mxu0 %v263
    %372 = vmatprep.subr.mxu0 %v267
    %373 = vmatpush1.msra.mxu0 %v266
    %374 = vmatprep.subr.mxu0 %v270
    %375 = vmatpush1.msra.mxu0 %v269
    %376 = vmatprep.subr.mxu0 %v273
    %377 = vmatpush1.msra.mxu0 %v272
    %378 = vmatprep.subr.mxu0 %v276
    %379 = vmatpush1.msra.mxu0 %v275
    %380 = vmatprep.subr.mxu0 %v279
    %381 = vmatpush1.msra.mxu0 %v278
    %382 = vmatprep.subr.mxu0 %v282
    %383 = vmatpush1.msra.mxu0 %v281
    %384 = vmatprep.subr.mxu0 %v285
    %385 = vmatpush1.msra.mxu0 %v284
    %386 = vmatprep.subr.mxu0 %v288
    %387 = vmatpush1.msra.mxu0 %v287
    %388 = vmatprep.subr.mxu0 %v291
    %389 = vmatpush1.msra.mxu0 %v290
    %390 = vmatprep.subr.mxu0 %v294
    %391 = vmatpush1.msra.mxu0 %v293
    %392 = vmatprep.subr.mxu0 %v297
    %393 = vmatpush1.msra.mxu0 %v296
    %394 = vmatprep.subr.mxu0 %v300
    %395 = vmatpush1.msra.mxu0 %v299
    %396 = vmatprep.subr.mxu0 %v303
    %397 = vmatpush1.msra.mxu0 %v302
    %398 = vmatprep.subr.mxu0 %v306
    %399 = vmatpush1.msra.mxu0 %v305
    %400 = vmatprep.subr.mxu0 %v309
    %401 = vmatpush1.msra.mxu0 %v308
    %402 = vmatprep.subr.mxu0 %v312
    %403 = vmatpush1.msra.mxu0 %v311
    %404 = vmatprep.subr.mxu0 %v315
    %405 = vmatpush1.msra.mxu0 %v314
    %406 = vmatprep.subr.mxu0 %v318
    %407 = vmatpush1.msra.mxu0 %v317
    %408 = vmatprep.subr.mxu0 %v321
    %409 = vmatpush1.msra.mxu0 %v320
    %410 = vmatprep.subr.mxu0 %v324
    %411 = vmatpush1.msra.mxu0 %v323
    %412 = vmatprep.subr.mxu0 %v327
    %413 = vmatpush1.msra.mxu0 %v326
    %414 = vmatprep.subr.mxu0 %v330
    %415 = vmatpush1.msra.mxu0 %v329
    %416 = vmatprep.subr.mxu0 %v333
    %417 = vmatpush1.msra.mxu0 %v332
    %418 = vmatprep.subr.mxu0 %v336
    %419 = vmatpush1.msra.mxu0 %v335
    %420 = vmatprep.subr.mxu0 %v339
    %421 = vmatpush1.msra.mxu0 %v338
    %422 = vmatprep.mubr.f32.mxu0 %v180
    %423 = vmatmul.mubr.f32.gmra.mrb[0].mxu0 %v179
    %v424 = vpop.f32.mrb[0].mxu0
    %v425 = vadd.f32 %v346, %v424
    %v426 = vpop.f32.mrb[0].mxu0
    %v427 = vadd.f32 %v350, %v426
    %428 = vdwg.mxu0
    %429 = vmatprep.subr.mxu0 0.0
    %430 = vmatpush1.msra.mxu0 %v247
    %431 = vmatprep.subr.mxu0 0.0
    %432 = vmatpush1.msra.mxu0 %v250
    %433 = vmatprep.subr.mxu0 0.0
    %434 = vmatpush1.msra.mxu0 %v253
    %435 = vmatprep.subr.mxu0 0.0
    %436 = vmatpush1.msra.mxu0 %v256
    %437 = vmatprep.subr.mxu0 0.0
    %438 = vmatpush1.msra.mxu0 %v259
    %439 = vmatprep.subr.mxu0 0.0
    %440 = vmatpush1.msra.mxu0 %v262
    %441 = vmatprep.subr.mxu0 0.0
    %442 = vmatpush1.msra.mxu0 %v265
    %443 = vmatprep.subr.mxu0 0.0
    %444 = vmatpush1.msra.mxu0 %v268
    %445 = vmatprep.subr.mxu0 0.0
    %446 = vmatpush1.msra.mxu0 %v271
    %447 = vmatprep.subr.mxu0 0.0
    %448 = vmatpush1.msra.mxu0 %v274
    %449 = vmatprep.subr.mxu0 0.0
    %450 = vmatpush1.msra.mxu0 %v277
    %451 = vmatprep.subr.mxu0 0.0
    %452 = vmatpush1.msra.mxu0 %v280
    %453 = vmatprep.subr.mxu0 0.0
    %454 = vmatpush1.msra.mxu0 %v283
    %455 = vmatprep.subr.mxu0 0.0
    %456 = vmatpush1.msra.mxu0 %v286
    %457 = vmatprep.subr.mxu0 0.0
    %458 = vmatpush1.msra.mxu0 %v289
    %459 = vmatprep.subr.mxu0 0.0
    %460 = vmatpush1.msra.mxu0 %v292
    %461 = vmatprep.subr.mxu0 0.0
    %462 = vmatpush1.msra.mxu0 %v295
    %463 = vmatprep.subr.mxu0 0.0
    %464 = vmatpush1.msra.mxu0 %v298
    %465 = vmatprep.subr.mxu0 0.0
    %466 = vmatpush1.msra.mxu0 %v301
    %467 = vmatprep.subr.mxu0 0.0
    %468 = vmatpush1.msra.mxu0 %v304
    %469 = vmatprep.subr.mxu0 0.0
    %470 = vmatpush1.msra.mxu0 %v307
    %471 = vmatprep.subr.mxu0 0.0
    %472 = vmatpush1.msra.mxu0 %v310
    %473 = vmatprep.subr.mxu0 0.0
    %474 = vmatpush1.msra.mxu0 %v313
    %475 = vmatprep.subr.mxu0 0.0
    %476 = vmatpush1.msra.mxu0 %v316
    %477 = vmatprep.subr.mxu0 0.0
    %478 = vmatpush1.msra.mxu0 %v319
    %479 = vmatprep.subr.mxu0 0.0
    %480 = vmatpush1.msra.mxu0 %v322
    %481 = vmatprep.subr.mxu0 0.0
    %482 = vmatpush1.msra.mxu0 %v325
    %483 = vmatprep.subr.mxu0 0.0
    %484 = vmatpush1.msra.mxu0 %v328
    %485 = vmatprep.subr.mxu0 0.0
    %486 = vmatpush1.msra.mxu0 %v331
    %487 = vmatprep.subr.mxu0 0.0
    %488 = vmatpush1.msra.mxu0 %v334
    %489 = vmatprep.subr.mxu0 0.0
    %490 = vmatpush1.msra.mxu0 %v337
    %491 = vmatprep.subr.mxu0 0.0
    %492 = vmatpush1.msra.mxu0 %v340
    %493 = vmatprep.mubr.f32.mxu0 %v180
    %494 = vmatmul.mubr.f32.gmra.mrb[0].mxu0 %v179
    %v495 = vpop.f32.mrb[0].mxu0
    %v496 = vadd.f32 %v354, %v495
    %v497 = vpop.f32.mrb[0].mxu0
    %498 = vdwg.mxu0
    %v499 = vmax.f32 %v425, 0.0
    %v500 = vmax.f32 %v427, 0.0
    %v501 = vmax.f32 %v496, 0.0
    %v502 = vld [vmem:[#allocation9] sm:$0xf]
    %v503 = vld [vmem:[#allocation9 + $0x4] sm:$0xf]
    %v504 = vld [vmem:[#allocation9 + $0x8] sm:$0xf]
    %v505 = vld [vmem:[#allocation9 + $0xc] sm:$0xf]
    %v506 = vld [vmem:[#allocation9 + $0x10] sm:$0xf]
    %v507 = vld [vmem:[#allocation9 + $0x14] sm:$0xf]
    %v508 = vld [vmem:[#allocation9 + $0x18] sm:$0xf]
    %v509 = vld [vmem:[#allocation9 + $0x1c] sm:$0xf]
    %v510 = vld [vmem:[#allocation9 + $0x20] sm:$0xf]
    %v511 = vld [vmem:[#allocation9 + $0x24] sm:$0xf]
    %v512 = vld [vmem:[#allocation9 + $0x28] sm:$0xf]
    %v513 = vld [vmem:[#allocation9 + $0x2c] sm:$0xf]
    %v514 = vld [vmem:[#allocation9 + $0x30] sm:$0xf]
    %v515 = vld [vmem:[#allocation9 + $0x34] sm:$0xf]
    %v516 = vld [vmem:[#allocation9 + $0x38] sm:$0xf]
    %v517 = vld [vmem:[#allocation9 + $0x3c] sm:$0xf]
    %v518 = vld [vmem:[#allocation9 + $0x40] sm:$0xf]
    %v519 = vld [vmem:[#allocation9 + $0x44] sm:$0xf]
    %v520 = vld [vmem:[#allocation9 + $0x48] sm:$0xf]
    %v521 = vld [vmem:[#allocation9 + $0x4c] sm:$0xf]
    %v522 = vld [vmem:[#allocation9 + $0x50] sm:$0xf]
    %v523 = vld [vmem:[#allocation9 + $0x54] sm:$0xf]
    %v524 = vld [vmem:[#allocation9 + $0x58] sm:$0xf]
    %v525 = vld [vmem:[#allocation9 + $0x5c] sm:$0xf]
    %v526 = vld [vmem:[#allocation9 + $0x60] sm:$0xf]
    %v527 = vld [vmem:[#allocation9 + $0x64] sm:$0xf]
    %v528 = vld [vmem:[#allocation9 + $0x68] sm:$0xf]
    %v529 = vld [vmem:[#allocation9 + $0x6c] sm:$0xf]
    %v530 = vld [vmem:[#allocation9 + $0x70] sm:$0xf]
    %v531 = vld [vmem:[#allocation9 + $0x74] sm:$0xf]
    %v532 = vld [vmem:[#allocation9 + $0x78] sm:$0xf]
    %v533 = vld [vmem:[#allocation9 + $0x7c] sm:$0xf]
    %v534 = vld [vmem:[#allocation9 + $0x80] sm:$0xf]
    %v535 = vld [vmem:[#allocation9 + $0x84] sm:$0xf]
    %v536 = vld [vmem:[#allocation9 + $0x88] sm:$0xf]
    %v537 = vld [vmem:[#allocation9 + $0x8c] sm:$0xf]
    %v538 = vld [vmem:[#allocation9 + $0x90] sm:$0xf]
    %v539 = vld [vmem:[#allocation9 + $0x94] sm:$0xf]
    %v540 = vld [vmem:[#allocation9 + $0x98] sm:$0xf]
    %v541 = vld [vmem:[#allocation9 + $0x9c] sm:$0xf]
    %v542 = vld [vmem:[#allocation9 + $0xa0] sm:$0xf]
    %v543 = vld [vmem:[#allocation9 + $0xa4] sm:$0xf]
    %v544 = vld [vmem:[#allocation9 + $0xa8] sm:$0xf]
    %v545 = vld [vmem:[#allocation9 + $0xac] sm:$0xf]
    %v546 = vld [vmem:[#allocation9 + $0xb0] sm:$0xf]
    %v547 = vld [vmem:[#allocation9 + $0xb4] sm:$0xf]
    %v548 = vld [vmem:[#allocation9 + $0xb8] sm:$0xf]
    %v549 = vld [vmem:[#allocation9 + $0xbc] sm:$0xf]
    %v550 = vunpack.c.l.bf16 %v502
    %v551 = vunpack.c.l.bf16 %v503
    %v552 = vunpack.c.l.bf16 %v504
    %v553 = vunpack.c.l.bf16 %v505
    %v554 = vunpack.c.l.bf16 %v506
    %v555 = vunpack.c.l.bf16 %v507
    %v556 = vunpack.c.l.bf16 %v508
    %v557 = vunpack.c.l.bf16 %v509
    %v558 = vunpack.c.l.bf16 %v510
    %v559 = vunpack.c.l.bf16 %v511
    %v560 = vunpack.c.l.bf16 %v512
    %v561 = vunpack.c.l.bf16 %v513
    %v562 = vunpack.c.l.bf16 %v514
    %v563 = vunpack.c.l.bf16 %v515
    %v564 = vunpack.c.l.bf16 %v516
    %v565 = vunpack.c.l.bf16 %v517
    %v566 = vunpack.c.l.bf16 %v518
    %v567 = vunpack.c.l.bf16 %v519
    %v568 = vunpack.c.l.bf16 %v520
    %v569 = vunpack.c.l.bf16 %v521
    %v570 = vunpack.c.l.bf16 %v522
    %v571 = vunpack.c.l.bf16 %v523
    %v572 = vunpack.c.l.bf16 %v524
    %v573 = vunpack.c.l.bf16 %v525
    %v574 = vunpack.c.l.bf16 %v526
    %v575 = vunpack.c.l.bf16 %v527
    %v576 = vunpack.c.l.bf16 %v528
    %v577 = vunpack.c.l.bf16 %v529
    %v578 = vunpack.c.l.bf16 %v530
    %v579 = vunpack.c.l.bf16 %v531
    %v580 = vunpack.c.l.bf16 %v532
    %v581 = vunpack.c.l.bf16 %v533
    %v582 = vunpack.c.l.bf16 %v534
    %v583 = vunpack.c.l.bf16 %v535
    %v584 = vunpack.c.l.bf16 %v536
    %v585 = vunpack.c.l.bf16 %v537
    %v586 = vunpack.c.l.bf16 %v538
    %v587 = vunpack.c.l.bf16 %v539
    %v588 = vunpack.c.l.bf16 %v540
    %v589 = vunpack.c.l.bf16 %v541
    %v590 = vunpack.c.l.bf16 %v542
    %v591 = vunpack.c.l.bf16 %v543
    %v592 = vunpack.c.l.bf16 %v544
    %v593 = vunpack.c.l.bf16 %v545
    %v594 = vunpack.c.l.bf16 %v546
    %v595 = vunpack.c.l.bf16 %v547
    %v596 = vunpack.c.l.bf16 %v548
    %v597 = vunpack.c.l.bf16 %v549
    %v598 = vld [vmem:[%s7] sm:$0x1]
    %v600 = vlaneseq
    %v601 = vshrl.u32 %v600, 7
    %v602 = vsub.s32 0, %v601
    %v603 = vrot.slane %v598, %v602
    %605 = vmatprep.subr.mxu0 0.0
    %606 = vmatpush1.msra.mxu0 %v550
    %607 = vmatprep.subr.mxu0 0.0
    %608 = vmatpush1.msra.mxu0 %v551
    %609 = vmatprep.subr.mxu0 0.0
    %610 = vmatpush1.msra.mxu0 %v552
    %611 = vmatprep.subr.mxu0 0.0
    %612 = vmatpush1.msra.mxu0 %v553
    %613 = vmatprep.subr.mxu0 0.0
    %614 = vmatpush1.msra.mxu0 %v554
    %615 = vmatprep.subr.mxu0 0.0
    %616 = vmatpush1.msra.mxu0 %v555
    %617 = vmatprep.subr.mxu0 0.0
    %618 = vmatpush1.msra.mxu0 %v556
    %619 = vmatprep.subr.mxu0 0.0
    %620 = vmatpush1.msra.mxu0 %v557
    %621 = vmatprep.subr.mxu0 0.0
    %622 = vmatpush1.msra.mxu0 %v558
    %623 = vmatprep.subr.mxu0 0.0
    %624 = vmatpush1.msra.mxu0 %v559
    %625 = vmatprep.subr.mxu0 0.0
    %626 = vmatpush1.msra.mxu0 %v560
    %627 = vmatprep.subr.mxu0 0.0
    %628 = vmatpush1.msra.mxu0 %v561
    %629 = vmatprep.subr.mxu0 0.0
    %630 = vmatpush1.msra.mxu0 %v562
    %631 = vmatprep.subr.mxu0 0.0
    %632 = vmatpush1.msra.mxu0 %v563
    %633 = vmatprep.subr.mxu0 0.0
    %634 = vmatpush1.msra.mxu0 %v564
    %635 = vmatprep.subr.mxu0 0.0
    %636 = vmatpush1.msra.mxu0 %v565
    %637 = vmatprep.subr.mxu0 0.0
    %638 = vmatpush1.msra.mxu0 %v566
    %639 = vmatprep.subr.mxu0 0.0
    %640 = vmatpush1.msra.mxu0 %v567
    %641 = vmatprep.subr.mxu0 0.0
    %642 = vmatpush1.msra.mxu0 %v568
    %643 = vmatprep.subr.mxu0 0.0
    %644 = vmatpush1.msra.mxu0 %v569
    %645 = vmatprep.subr.mxu0 0.0
    %646 = vmatpush1.msra.mxu0 %v570
    %647 = vmatprep.subr.mxu0 0.0
    %648 = vmatpush1.msra.mxu0 %v571
    %649 = vmatprep.subr.mxu0 0.0
    %650 = vmatpush1.msra.mxu0 %v572
    %651 = vmatprep.subr.mxu0 0.0
    %652 = vmatpush1.msra.mxu0 %v573
    %653 = vmatprep.subr.mxu0 0.0
    %654 = vmatpush1.msra.mxu0 %v574
    %655 = vmatprep.subr.mxu0 0.0
    %656 = vmatpush1.msra.mxu0 %v575
    %657 = vmatprep.subr.mxu0 0.0
    %658 = vmatpush1.msra.mxu0 %v576
    %659 = vmatprep.subr.mxu0 0.0
    %660 = vmatpush1.msra.mxu0 %v577
    %661 = vmatprep.subr.mxu0 0.0
    %662 = vmatpush1.msra.mxu0 %v578
    %663 = vmatprep.subr.mxu0 0.0
    %664 = vmatpush1.msra.mxu0 %v579
    %665 = vmatprep.subr.mxu0 0.0
    %666 = vmatpush1.msra.mxu0 %v580
    %667 = vmatprep.subr.mxu0 0.0
    %668 = vmatpush1.msra.mxu0 %v581
    %669 = vmatprep.mubr.f32.mxu0 %v500
    %670 = vmatmul.mubr.f32.gmra.mrb[0].mxu0 %v499
    %v671 = vpop.f32.mrb[0].mxu0
    %v672 = vadd.f32 %v603, %v671
    %v673 = vpop.f32.mrb[0].mxu0
    %674 = vdwg.mxu0
    %675 = vmatprep.subr.mxu0 0.0
    %676 = vmatpush1.msra.mxu0 %v582
    %677 = vmatprep.subr.mxu0 0.0
    %678 = vmatpush1.msra.mxu0 %v583
    %679 = vmatprep.subr.mxu0 0.0
    %680 = vmatpush1.msra.mxu0 %v584
    %681 = vmatprep.subr.mxu0 0.0
    %682 = vmatpush1.msra.mxu0 %v585
    %683 = vmatprep.subr.mxu0 0.0
    %684 = vmatpush1.msra.mxu0 %v586
    %685 = vmatprep.subr.mxu0 0.0
    %686 = vmatpush1.msra.mxu0 %v587
    %687 = vmatprep.subr.mxu0 0.0
    %688 = vmatpush1.msra.mxu0 %v588
    %689 = vmatprep.subr.mxu0 0.0
    %690 = vmatpush1.msra.mxu0 %v589
    %691 = vmatprep.subr.mxu0 0.0
    %692 = vmatpush1.msra.mxu0 %v590
    %693 = vmatprep.subr.mxu0 0.0
    %694 = vmatpush1.msra.mxu0 %v591
    %695 = vmatprep.subr.mxu0 0.0
    %696 = vmatpush1.msra.mxu0 %v592
    %697 = vmatprep.subr.mxu0 0.0
    %698 = vmatpush1.msra.mxu0 %v593
    %699 = vmatprep.subr.mxu0 0.0
    %700 = vmatpush1.msra.mxu0 %v594
    %701 = vmatprep.subr.mxu0 0.0
    %702 = vmatpush1.msra.mxu0 %v595
    %703 = vmatprep.subr.mxu0 0.0
    %704 = vmatpush1.msra.mxu0 %v596
    %705 = vmatprep.subr.mxu0 0.0
    %706 = vmatpush1.msra.mxu0 %v597
    %707 = vmatprep.subr.mxu0 0.0
    %708 = vmatpush1.msra.mxu0 0.0
    %709 = vmatprep.subr.mxu0 0.0
    %710 = vmatpush1.msra.mxu0 0.0
    %711 = vmatprep.subr.mxu0 0.0
    %712 = vmatpush1.msra.mxu0 0.0
    %713 = vmatprep.subr.mxu0 0.0
    %714 = vmatpush1.msra.mxu0 0.0
    %715 = vmatprep.subr.mxu0 0.0
    %716 = vmatpush1.msra.mxu0 0.0
    %717 = vmatprep.subr.mxu0 0.0
    %718 = vmatpush1.msra.mxu0 0.0
    %719 = vmatprep.subr.mxu0 0.0
    %720 = vmatpush1.msra.mxu0 0.0
    %721 = vmatprep.subr.mxu0 0.0
    %722 = vmatpush1.msra.mxu0 0.0
    %723 = vmatprep.subr.mxu0 0.0
    %724 = vmatpush1.msra.mxu0 0.0
    %725 = vmatprep.subr.mxu0 0.0
    %726 = vmatpush1.msra.mxu0 0.0
    %727 = vmatprep.subr.mxu0 0.0
    %728 = vmatpush1.msra.mxu0 0.0
    %729 = vmatprep.subr.mxu0 0.0
    %730 = vmatpush1.msra.mxu0 0.0
    %731 = vmatprep.subr.mxu0 0.0
    %732 = vmatpush1.msra.mxu0 0.0
    %733 = vmatprep.subr.mxu0 0.0
    %734 = vmatpush1.msra.mxu0 0.0
    %735 = vmatprep.subr.mxu0 0.0
    %736 = vmatpush1.msra.mxu0 0.0
    %737 = vmatprep.subr.mxu0 0.0
    %738 = vmatpush1.msra.mxu0 0.0
    %739 = vmatprep.mubr.f32.mxu0 0.0
    %740 = vmatmul.mubr.f32.gmra.mrb[0].mxu0 %v501
    %v741 = vpop.f32.mrb[0].mxu0
    %v742 = vadd.f32 %v672, %v741
    %v743 = vpop.f32.mrb[0].mxu0
    %744 = vdwg.mxu0
    %v745 = vtanh.pop %v742
    %v746 = vstv %s84
    %v747 = vmul.f32 %v746, %v745
    %748 = vst [vmem:[#allocation11] sm:$0xff] %v747
    // Predicated region
    $region50: #{tpu_custom_call.1} parent=1 // pred_check
      _
    $region51: #{tpu_custom_call.1} parent=1 // pred_check_branch
      %750 = sbr.rel (0) target = $region53
    $region52: #{tpu_custom_call.1} parent=1 // pred_region
      %s752 = ssub.s32 128, 128
      %753 = vsyncadd [#allocation5], %s752
      %s755 = sshll.u32 [#allocation11], 4
      %s756 = int_to_ptr.vmem [resolvable:$true] %s755
      %758 = dma.vmem_to_hbm [thread:$0]  %s756, 128, %s8, [#allocation5]
    $region53: #{tpu_custom_call.1} parent=1 // pred_fallthru
      _
    // Predicated region
    $region54: #{tpu_custom_call.1} parent=1 // pred_check
      _
    $region55: #{tpu_custom_call.1} parent=1 // pred_check_branch
      %760 = sbr.rel (0) target = $region57
    $region56: #{tpu_custom_call.1} parent=1 // pred_region
      %761 = dma.done [#allocation5], 128
    $region57: #{tpu_custom_call.1} parent=1 // pred_fallthru
      _
    %762 = vsyncpa [#allocation4], 1
    %763 = vsyncpa [#allocation7], 1
    %764 = vsyncpa [#allocation10], 1
    %765 = vsyncpa [#allocation5], 1

</llo_original>
